<compile_context>
chip_gen: v6e
topology: v6e:2x2x1
jax: 0.10.0
libtpu: 0.0.40
codegen_flags: <defaults>
</compile_context>

<pallas_src>
import numpy as np
import jax
import jax.numpy as jnp
from jax.experimental import pallas as pl
from jax.experimental.pallas import tpu as pltpu

# Per-layer weights streamed into the fused kernel.  We1a is folded into the
# precomputed edge_attr projection instead of being streamed.
WEIGHT_KEYS = ("We1", "We1r", "be1", "We2", "be2",
               "Wc1", "bc1", "wc2", "Wn1", "bn1", "Wn2", "bn2")


def _silu(v):
    return v * jax.nn.sigmoid(v)


# ------------------- edge_attr @ We1a per-layer precompute ------------------- #

def _ea_proj_kernel(ea_ref, w_ref, o_ref):
    ea = ea_ref[...]                              # (E_pad, Fe)
    w = w_ref[0]                                  # (Fe, H)
    acc = jnp.zeros((ea.shape[0], w.shape[1]), jnp.float32)
    for f in range(ea.shape[1]):                  # Fe is tiny -> VPU broadcasts
        acc = acc + ea[:, f:f + 1] * w[f:f + 1, :]
    o_ref[0] = acc


def ea_proj_pallas(ea, We1a):
    """(E_pad, Fe) x (L, Fe, H) -> (L, E_pad, H); one grid step per layer."""
    E_pad, Fe = ea.shape
    L, _, H = We1a.shape
    return pl.pallas_call(
        _ea_proj_kernel,
        out_shape=jax.ShapeDtypeStruct((L, E_pad, H), jnp.float32),
        grid=(L,),
        in_specs=[pl.BlockSpec((E_pad, Fe), lambda l: (0, 0)),
                  pl.BlockSpec((1, Fe, H), lambda l: (l, 0, 0))],
        out_specs=pl.BlockSpec((1, E_pad, H), lambda l: (l, 0, 0)),
    )(ea, We1a)


# ---------------------- fused multi-layer E_GCL kernel ---------------------- #

def _egnn_layers_kernel(h_in_ref, x0_ref,                    # raw node feats / coords
                        rows_ref, cols_ref, rows_t_ref,      # edge ids (sublane & lane layouts)
                        eap_ref,                             # precomputed edge_attr @ We1a tile
                        We1_ref, We1r_ref, be1_ref,          # per-layer weights (1-layer blocks)
                        We2_ref, be2_ref,
                        Wc1_ref, bc1_ref, wc2_ref,
                        Wn1_ref, bn1_ref, Wn2_ref, bn2_ref,
                        emb_w_ref, emb_b_ref,                # fused embedding Linear
                        out_w_ref, out_b_ref,                # fused output Linear
                        h_out_ref, x_out_ref,                # outputs
                        h_state, x_state, m_agg, x_del):     # resident VMEM node state
    f32 = jnp.float32
    layer = pl.program_id(0)
    tile = pl.program_id(1)
    n_tiles = pl.num_programs(1)
    N = h_state.shape[0]
    T = rows_ref.shape[0]

    # ---- layer init (first edge tile of each layer) ----
    @pl.when(tile == 0)
    def _init():
        @pl.when(layer == 0)
        def _embed():                             # fused embedding Linear
            h_state[...] = (jnp.dot(h_in_ref[...], emb_w_ref[...],
                                    preferred_element_type=f32) + emb_b_ref[...])
            x_state[...] = x0_ref[...]

        m_agg[...] = jnp.zeros_like(m_agg)
        x_del[...] = jnp.zeros_like(x_del)

    # ---- one-hot gather/scatter matrices (MXU).  Padded edges have id == N,
    # so their one-hot rows/columns are all zero and contribute nothing.
    rid = rows_ref[...]                                      # (T, 1) int32
    cid = cols_ref[...]                                      # (T, 1) int32
    rid_lane = rows_t_ref[...]                               # (1, T) int32
    node_iota = jax.lax.broadcasted_iota(jnp.int32, (T, N), 1)
    onehot_r = (node_iota == rid).astype(f32)                # (T, N)
    onehot_c = (node_iota == cid).astype(f32)                # (T, N)
    onehot_rT = (jax.lax.broadcasted_iota(jnp.int32, (N, T), 0)
                 == rid_lane).astype(f32)                    # (N, T)

    h = h_state[...]                                         # (N, H)
    x = x_state[...]                                         # (N, 3)
    hs = jnp.dot(onehot_r, h, preferred_element_type=f32)    # h[row]        (T, H)
    ht = jnp.dot(onehot_c, h, preferred_element_type=f32)    # h[col]        (T, H)
    xd = jnp.dot(onehot_r - onehot_c, x,
                 preferred_element_type=f32)                 # x[row]-x[col] (T, 3)

    # ---- coord2radial ----
    radial = jnp.sum(xd * xd, axis=1, keepdims=True)         # (T, 1)
    inv = pl.reciprocal(jnp.sqrt(radial + 1e-8) + 1.0, approx=True)
    xdn = xd * inv

    # ---- edge_model: edge_mlp(cat([h[row], h[col], radial, edge_attr])) ----
    # (T,2H)@(2H,H) MXU matmul for the node-feature blocks; the K=1 radial
    # block is a VPU broadcast; the edge_attr block arrives precomputed.
    z = jnp.dot(jnp.concatenate([hs, ht], axis=1), We1_ref[0],
                preferred_element_type=f32)
    z = z + radial * We1r_ref[0]                             # (T,1) * (1,H)
    z = z + eap_ref[0]                                       # edge_attr @ We1a
    m = _silu(z + be1_ref[0])
    m = _silu(jnp.dot(m, We2_ref[0], preferred_element_type=f32) + be2_ref[0])

    # ---- coord_model: trans = coord_diff * coord_mlp(edge_feat) ----
    cmid = _silu(jnp.dot(m, Wc1_ref[0], preferred_element_type=f32) + bc1_ref[0])
    tcoef = jnp.sum(cmid * wc2_ref[0], axis=1, keepdims=True)  # (T,1), lane reduce
    trans = xdn * tcoef                                        # (T, 3)

    # ---- segment-sum scatter: one transposed one-hot MXU matmul per tile ----
    m_agg[...] = m_agg[...] + jnp.dot(onehot_rT, m, preferred_element_type=f32)
    x_del[...] = x_del[...] + jnp.dot(onehot_rT, trans, preferred_element_type=f32)

    # ---- layer finalize (last edge tile): node model + coord update ----
    @pl.when(tile == n_tiles - 1)
    def _finalize():
        hh = h_state[...]
        n_in = jnp.concatenate([hh, m_agg[...]], axis=1)       # (N, 2H)
        nmid = _silu(jnp.dot(n_in, Wn1_ref[0], preferred_element_type=f32)
                     + bn1_ref[0])
        h_new = hh + (jnp.dot(nmid, Wn2_ref[0], preferred_element_type=f32)
                      + bn2_ref[0])                            # recurrent=True
        x_new = x_state[...] + x_del[...]                      # agg='sum'
        h_state[...] = h_new
        x_state[...] = x_new

        @pl.when(layer == pl.num_programs(0) - 1)
        def _write_out():                                      # fused output Linear
            h_out_ref[...] = (jnp.dot(h_new, out_w_ref[...],
                                      preferred_element_type=f32) + out_b_ref[...])
            x_out_ref[...] = x_new


def egnn_layers_pallas(h_raw, x, ea_proj, rows_s, cols_s, rows_l, stacked,
                       emb_w, emb_b, out_w, out_b, n_layers, edge_tile):
    N, F_in = h_raw.shape
    D = x.shape[1]
    H = emb_w.shape[1]
    F_out = out_w.shape[1]
    E_pad = rows_s.shape[0]
    assert E_pad % edge_tile == 0
    n_tiles = E_pad // edge_tile

    def const_map(l, t): return (0, 0)
    def edge_map(l, t): return (t, 0)
    def edge_lane_map(l, t): return (0, t)
    def layer_map(l, t): return (l, 0, 0)
    def ea_map(l, t): return (l, t, 0)

    in_specs = (
        [pl.BlockSpec((N, F_in), const_map),               # raw node feats
         pl.BlockSpec((N, D), const_map),                  # coords
         pl.BlockSpec((edge_tile, 1), edge_map),           # row ids (sublane layout)
         pl.BlockSpec((edge_tile, 1), edge_map),           # col ids (sublane layout)
         pl.BlockSpec((1, edge_tile), edge_lane_map),      # row ids (lane layout)
         pl.BlockSpec((1, edge_tile, H), ea_map)]          # edge_attr @ We1a tile
        + [pl.BlockSpec((1,) + tuple(stacked[k].shape[1:]), layer_map)
           for k in WEIGHT_KEYS]
        + [pl.BlockSpec((F_in, H), const_map),             # emb_w
           pl.BlockSpec((1, H), const_map),                # emb_b
           pl.BlockSpec((H, F_out), const_map),            # out_w
           pl.BlockSpec((1, F_out), const_map)])           # out_b
    out_specs = (pl.BlockSpec((N, F_out), const_map),
                 pl.BlockSpec((N, D), const_map))
    scratch = [pltpu.VMEM((N, H), jnp.float32),            # h_state (resident)
               pltpu.VMEM((N, D), jnp.float32),            # x_state (resident)
               pltpu.VMEM((N, H), jnp.float32),            # m_agg accumulator
               pltpu.VMEM((N, D), jnp.float32)]            # x_del accumulator

    return pl.pallas_call(
        _egnn_layers_kernel,
        out_shape=(jax.ShapeDtypeStruct((N, F_out), jnp.float32),
                   jax.ShapeDtypeStruct((N, D), jnp.float32)),
        grid_spec=pltpu.PrefetchScalarGridSpec(
            num_scalar_prefetch=0,
            grid=(n_layers, n_tiles),
            in_specs=in_specs,
            out_specs=out_specs,
            scratch_shapes=scratch),
        compiler_params=pltpu.CompilerParams(
            dimension_semantics=("arbitrary", "arbitrary"),
            # v7x has 64 MiB physical VMEM; keep headroom (v5e/v6e have 128 MiB).
            vmem_limit_bytes=48 * 1024 * 1024),
    )(h_raw, x, rows_s, cols_s, rows_l, ea_proj,
      *[stacked[k] for k in WEIGHT_KEYS],
      emb_w, emb_b, out_w, out_b)


# ------------------------------ parameter init ------------------------------ #

def _init_linear(key, fan_in, fan_out, with_bias=True):
    # emulates nn.Linear default init; weights stored (in, out) so y = x @ W + b
    k1, k2 = jax.random.split(key)
    bound = 1.0 / np.sqrt(fan_in)
    W = jax.random.uniform(k1, (fan_in, fan_out), jnp.float32, -bound, bound)
    if not with_bias:
        return W, None
    b = jax.random.uniform(k2, (1, fan_out), jnp.float32, -bound, bound)
    return W, b


def init_egnn_params(key, in_node_nf, in_edge_nf, hidden_nf, out_node_nf, n_layers):
    keys = jax.random.split(key, 2 + n_layers)
    emb_w, emb_b = _init_linear(keys[0], in_node_nf, hidden_nf)
    out_w, out_b = _init_linear(keys[1], hidden_nf, out_node_nf)
    per_layer = []
    for l in range(n_layers):
        ks = jax.random.split(keys[2 + l], 6)
        # edge_mlp first linear, split along its concatenated input blocks
        W_full, be1 = _init_linear(ks[0], 2 * hidden_nf + 1 + in_edge_nf, hidden_nf)
        We2, be2 = _init_linear(ks[1], hidden_nf, hidden_nf)
        Wc1, bc1 = _init_linear(ks[2], hidden_nf, hidden_nf)
        # coord_mlp final layer: xavier_uniform with gain=0.001, no bias
        gain = 0.001
        xb = gain * np.sqrt(6.0 / (hidden_nf + 1))
        wc2 = jax.random.uniform(ks[3], (1, hidden_nf), jnp.float32, -xb, xb)
        Wn1, bn1 = _init_linear(ks[4], 2 * hidden_nf, hidden_nf)
        Wn2, bn2 = _init_linear(ks[5], hidden_nf, hidden_nf)
        per_layer.append(dict(
            We1=W_full[:2 * hidden_nf],
            We1r=W_full[2 * hidden_nf:2 * hidden_nf + 1],
            We1a=W_full[2 * hidden_nf + 1:],
            be1=be1, We2=We2, be2=be2,
            Wc1=Wc1, bc1=bc1, wc2=wc2,
            Wn1=Wn1, bn1=bn1, Wn2=Wn2, bn2=bn2))
    all_keys = WEIGHT_KEYS + ("We1a",)
    stacked = {k: jnp.stack([lay[k] for lay in per_layer], axis=0) for k in all_keys}
    return dict(emb_w=emb_w, emb_b=emb_b, out_w=out_w, out_b=out_b, layers=stacked)


# -------------------------------- forward pass ------------------------------ #

def egnn_forward(h, x, row, col, edge_attr, params, n_layers, edge_tile=128):
    N = h.shape[0]
    E = int(row.shape[0])
    E_pad = ((E + edge_tile - 1) // edge_tile) * edge_tile
    pad = E_pad - E
    # Pad edges with node id == N: their one-hot rows/cols are all zero, so
    # padded edges gather zeros and scatter nothing (no explicit mask needed).
    row_p = jnp.pad(row.astype(jnp.int32), (0, pad), constant_values=N)
    col_p = jnp.pad(col.astype(jnp.int32), (0, pad), constant_values=N)
    ea_p = jnp.pad(edge_attr, ((0, pad), (0, 0)))

    rows_s = row_p.reshape(E_pad, 1)        # sublane layout (gather one-hots)
    cols_s = col_p.reshape(E_pad, 1)
    rows_l = row_p.reshape(1, E_pad)        # lane layout (scatter one-hot)

    ea_proj = ea_proj_pallas(ea_p, params["layers"]["We1a"])
    h_out, x_out = egnn_layers_pallas(
        h, x, ea_proj, rows_s, cols_s, rows_l, params["layers"],
        params["emb_w"], params["emb_b"], params["out_w"], params["out_b"],
        n_layers, edge_tile)
    return h_out, x_out


# pure-JAX reference (mirrors the PyTorch module semantics)
def egnn_reference(h, x, row, col, edge_attr, params, n_layers):
    h = h @ params["emb_w"] + params["emb_b"]
    N = h.shape[0]
    for l in range(n_layers):
        p = {k: v[l] for k, v in params["layers"].items()}
        xd = x[row] - x[col]
        radial = jnp.sum(xd ** 2, axis=1, keepdims=True)
        xdn = xd / (jnp.sqrt(radial + 1e-8) + 1.0)
        W1 = jnp.concatenate([p["We1"], p["We1r"], p["We1a"]], axis=0)
        e_in = jnp.concatenate([h[row], h[col], radial, edge_attr], axis=1)
        m = _silu(e_in @ W1 + p["be1"])
        m = _silu(m @ p["We2"] + p["be2"])
        t = _silu(m @ p["Wc1"] + p["bc1"]) @ p["wc2"].T
        x = x + jax.ops.segment_sum(xdn * t, row, num_segments=N)
        agg = jax.ops.segment_sum(m, row, num_segments=N)
        n_in = jnp.concatenate([h, agg], axis=1)
        h = h + (_silu(n_in @ p["Wn1"] + p["bn1"]) @ p["Wn2"] + p["bn2"])
    h = h @ params["out_w"] + params["out_b"]
    return h, x


if __name__ == "__main__":
    # hidden_nf=128 keeps every matmul output / store lane-dense on TPU.
    N, HIDDEN, IN_NODE, IN_EDGE, OUT_NODE, N_LAYERS = 16, 128, 5, 2, 5, 4
    EDGE_TILE = 128

    # fully-connected directed edge list (i != j): E = 240 -> padded to 256 (2 tiles)
    rows, cols = [], []
    for i in range(N):
        for j in range(N):
            if i != j:
                rows.append(i)
                cols.append(j)
    row = jnp.array(rows, dtype=jnp.int32)
    col = jnp.array(cols, dtype=jnp.int32)
    E = int(row.shape[0])

    key = jax.random.PRNGKey(0)
    k_h, k_x, k_e, k_p = jax.random.split(key, 4)
    h0 = jax.random.normal(k_h, (N, IN_NODE), jnp.float32)
    x0 = jax.random.normal(k_x, (N, 3), jnp.float32)
    ea = jax.random.normal(k_e, (E, IN_EDGE), jnp.float32)

    params = init_egnn_params(k_p, IN_NODE, IN_EDGE, HIDDEN, OUT_NODE, N_LAYERS)

    h_out, x_out = egnn_forward(h0, x0, row, col, ea, params, N_LAYERS,
                                edge_tile=EDGE_TILE)
    jax.block_until_ready((h_out, x_out))

    h_ref, x_ref = egnn_reference(h0, x0, row, col, ea, params, N_LAYERS)
    assert h_out.shape == (N, OUT_NODE) and x_out.shape == (N, 3)
    assert np.allclose(np.asarray(h_out), np.asarray(h_ref), atol=1e-3, rtol=1e-3)
    assert np.allclose(np.asarray(x_out), np.asarray(x_ref), atol=1e-3, rtol=1e-3)

    print("KERNEL_OK")
</pallas_src>

<mosaic_0001>
module attributes {stable_mosaic.version = 11 : i64} {
  func.func @_ea_proj_kernel(%arg0: i32, %arg1: memref<256x2xf32, #tpu.memory_space<vmem>>, %arg2: memref<1x2x128xf32, #tpu.memory_space<vmem>>, %arg3: memref<1x256x128xf32, #tpu.memory_space<vmem>>) attributes {dimension_semantics = [#tpu.dimension_semantics<arbitrary>], iteration_bounds = array<i64: 4>, scalar_prefetch = 0 : i64, scratch_operands = 0 : i64, tpu.core_type = #tpu.core_type<tc>, window_params = [{pipeline_mode = #tpu.pipeline_mode<synchronous>, transform_indices = @transform_0, window_bounds = array<i64: 256, 2>}, {transform_indices = @transform_1, window_bounds = array<i64: 1, 2, 128>}, {transform_indices = @transform_2, window_bounds = array<i64: 1, 256, 128>}]} {
    %c0 = arith.constant 0 : index
    %c0_0 = arith.constant 0 : index
    %0 = vector.load %arg1[%c0, %c0_0] : memref<256x2xf32, #tpu.memory_space<vmem>>, vector<256x2xf32>
    %c0_1 = arith.constant 0 : index
    %c0_2 = arith.constant 0 : index
    %c0_3 = arith.constant 0 : index
    %1 = vector.load %arg2[%c0_1, %c0_2, %c0_3] : memref<1x2x128xf32, #tpu.memory_space<vmem>>, vector<1x2x128xf32>
    %2 = vector.shape_cast %1 : vector<1x2x128xf32> to vector<2x128xf32>
    %cst = arith.constant 0.000000e+00 : f32
    %3 = vector.broadcast %cst : f32 to vector<256x128xf32>
    %4 = vector.extract_strided_slice %0 {offsets = [0, 0], sizes = [256, 1], strides = [1, 1]} : vector<256x2xf32> to vector<256x1xf32>
    %5 = vector.extract_strided_slice %2 {offsets = [0, 0], sizes = [1, 128], strides = [1, 1]} : vector<2x128xf32> to vector<1x128xf32>
    %6 = vector.broadcast %4 : vector<256x1xf32> to vector<256x128xf32>
    %7 = vector.broadcast %5 : vector<1x128xf32> to vector<256x128xf32>
    %8 = arith.mulf %6, %7 : vector<256x128xf32>
    %9 = arith.addf %3, %8 : vector<256x128xf32>
    %10 = vector.extract_strided_slice %0 {offsets = [0, 1], sizes = [256, 1], strides = [1, 1]} : vector<256x2xf32> to vector<256x1xf32>
    %11 = vector.extract_strided_slice %2 {offsets = [1, 0], sizes = [1, 128], strides = [1, 1]} : vector<2x128xf32> to vector<1x128xf32>
    %12 = vector.broadcast %10 : vector<256x1xf32> to vector<256x128xf32>
    %13 = vector.broadcast %11 : vector<1x128xf32> to vector<256x128xf32>
    %14 = arith.mulf %12, %13 : vector<256x128xf32>
    %15 = arith.addf %9, %14 : vector<256x128xf32>
    %c0_4 = arith.constant 0 : index
    %c0_5 = arith.constant 0 : index
    %c0_6 = arith.constant 0 : index
    %16 = vector.load %arg3[%c0_4, %c0_5, %c0_6] : memref<1x256x128xf32, #tpu.memory_space<vmem>>, vector<1x256x128xf32>
    %17 = vector.shape_cast %16 : vector<1x256x128xf32> to vector<256x128xf32>
    %18 = vector.shape_cast %15 : vector<256x128xf32> to vector<1x256x128xf32>
    tpu.vector_store %arg3[%c0_4, %c0_5, %c0_6], %18 {strides = array<i32>} : memref<1x256x128xf32, #tpu.memory_space<vmem>>, vector<1x256x128xf32>,
    return
  }
  func.func @transform_0(%arg0: i32) -> (i32, i32) {
    %c0_i32 = arith.constant 0 : i32
    %c0_i32_0 = arith.constant 0 : i32
    %c0_i32_1 = arith.constant 0 : i32
    return %c0_i32, %c0_i32_0 : i32, i32
  }
  func.func @transform_1(%arg0: i32) -> (i32, i32, i32) {
    %c0_i32 = arith.constant 0 : i32
    %c0_i32_0 = arith.constant 0 : i32
    %c0_i32_1 = arith.constant 0 : i32
    return %arg0, %c0_i32, %c0_i32_0 : i32, i32, i32
  }
  func.func @transform_2(%arg0: i32) -> (i32, i32, i32) {
    %c0_i32 = arith.constant 0 : i32
    %c0_i32_0 = arith.constant 0 : i32
    %c0_i32_1 = arith.constant 0 : i32
    return %arg0, %c0_i32, %c0_i32_0 : i32, i32, i32
  }
}

</mosaic_0001>

<llo_original>
// kernel: tpu_custom_call.1
$region0: #{tpu_custom_call.1}
  #allocation0 [shape = 'u32[]', space=smem, size = 0x4, offset = 0x4, fixed_abs, tag = 'smem constant byte address 0x4 - core index']
  #allocation1 [shape = 'u32[144,128]{1,0:T(1,128)}', space=vmem, size = 0x12000, scoped, tag = 'internal scratch']
  %s0 = inlined_call_operand.vmem [shape: f32[256,2], index: 0, kind: input, shape index: {}]
  %s1 = inlined_call_operand.vmem [shape: f32[4,2,128], index: 1, kind: input, shape index: {}]
  %s2 = inlined_call_operand.hbm [shape: f32[4,256,128], index: 2, kind: output, shape index: {}]
  %s3 = sld [smem:[#allocation0]]
  $region41: #{tpu_custom_call.1} parent=0
    _
  %s5 = ssub.s32 1, %s3
  %s6 = scalar_select 0, %s5, %s3
  $region1: #{tpu_custom_call.1} parent=0
    #allocation2 [shape = 'u8[262144]{0}', space=vmem, size = 0x40000, scoped, tag = 'output window, operand 0']
    #allocation3 [shape = 's32[2]{0}', space=sflag, size = 0x8, scoped, tag = 'scoped memory for tpu_custom_call.1']
    %7 = vsyncpa [#allocation3], 0
    %s8 = scalar_lea.sflag [#allocation3], 1
    %9 = vsyncpa %s8, 0
    loop: start=0, step=1, limit=6
    $region2: #{tpu_custom_call.1} parent=1 // loop_pre_header
      _
    $region3: #{tpu_custom_call.1} parent=1 // loop_header
      %s11 = sphi 0, %s15
      %p12 = scmp.ge.s32.totalorder %s11, 6
      %s19 = sphi 0, %s19
      %s21 = sphi 0, %s19
      %s22 = sphi 0, %s21
      %s36 = sphi 0, %s22
      %s42 = sphi 0, %s44
      %s45 = sphi 0, %s42
      %s46 = sphi 0, %s45
      %s62 = sphi 0, %s46
      %s68 = sphi 0, %s70
      %s71 = sphi 0, %s68
      %s72 = sphi 0, %s71
      %s88 = sphi 0, %s72
    $region4: #{tpu_custom_call.1} parent=1 // loop_header_branch
      %14 = sbr.rel (%p12) target = $region8
    $region5: #{tpu_custom_call.1} parent=1 // loop_body
      %s16 = ssub.s32 %s11, 1
      %s17 = ssub.s32 %s11, 2
      %s18 = sadd.s32 %s11, 1
      %s20 = sadd.s32 %s19, 1
      %p23 = scmp.eq.s32.totalorder %s11, 3
      %p24 = scmp.ne.s32.totalorder %s19, %s21
      %p25 = scmp.eq.s32.totalorder %s11, 0
      %p26 = por %p24, %p25
      %p27 = scmp.ne.s32.totalorder %s19, %s21
      %p28 = scmp.eq.s32.totalorder %s16, 3
      %p29 = por %p27, %p28
      %p30 = scmp.ne.s32.totalorder %s21, %s22
      %p31 = scmp.eq.s32.totalorder %s16, 0
      %p32 = por %p30, %p31
      %p33 = scmp.ne.s32.totalorder %s21, %s22
      %p34 = scmp.eq.s32.totalorder %s17, 3
      %p35 = por %p33, %p34
      %p37 = scmp.ne.s32.totalorder %s22, %s36
      %p38 = scmp.eq.s32.totalorder %s17, 0
      %p39 = por %p37, %p38
      %s40 = ssub.s32 %s11, %s18
      %p41 = scmp.eq.s32.totalorder %s40, 0
      %s43 = sadd.s32 %s42, 1
      %s44 = scalar_select %p41, %s42, %s43
      %p47 = pneg %p41
      %p48 = scmp.eq.s32.totalorder %s11, 3
      %p49 = por %p47, %p48
      %p50 = scmp.ne.s32.totalorder %s42, %s45
      %p51 = scmp.eq.s32.totalorder %s11, 0
      %p52 = por %p50, %p51
      %p53 = scmp.ne.s32.totalorder %s42, %s45
      %p54 = scmp.eq.s32.totalorder %s16, 3
      %p55 = por %p53, %p54
      %p56 = scmp.ne.s32.totalorder %s45, %s46
      %p57 = scmp.eq.s32.totalorder %s16, 0
      %p58 = por %p56, %p57
      %p59 = scmp.ne.s32.totalorder %s45, %s46
      %p60 = scmp.eq.s32.totalorder %s17, 3
      %p61 = por %p59, %p60
      %p63 = scmp.ne.s32.totalorder %s46, %s62
      %p64 = scmp.eq.s32.totalorder %s17, 0
      %p65 = por %p63, %p64
      %s66 = ssub.s32 %s11, %s18
      %p67 = scmp.eq.s32.totalorder %s66, 0
      %s69 = sadd.s32 %s68, 1
      %s70 = scalar_select %p67, %s68, %s69
      %p73 = pneg %p67
      %p74 = scmp.eq.s32.totalorder %s11, 3
      %p75 = por %p73, %p74
      %p76 = scmp.ne.s32.totalorder %s68, %s71
      %p77 = scmp.eq.s32.totalorder %s11, 0
      %p78 = por %p76, %p77
      %p79 = scmp.ne.s32.totalorder %s68, %s71
      %p80 = scmp.eq.s32.totalorder %s16, 3
      %p81 = por %p79, %p80
      %p82 = scmp.ne.s32.totalorder %s71, %s72
      %p83 = scmp.eq.s32.totalorder %s16, 0
      %p84 = por %p82, %p83
      %p85 = scmp.ne.s32.totalorder %s71, %s72
      %p86 = scmp.eq.s32.totalorder %s17, 3
      %p87 = por %p85, %p86
      %p89 = scmp.ne.s32.totalorder %s72, %s88
      %p90 = scmp.eq.s32.totalorder %s17, 0
      %p91 = por %p89, %p90
      %p92 = scmp.le.s32.totalorder 1, %s11
      %p93 = scmp.lt.s32.totalorder %s11, 5
      %p94 = pnand %p92, %p93
      %p95 = pneg %p94
      // Predicated region
      $region9: #{tpu_custom_call.1} parent=5 // pred_check
        _
      $region10: #{tpu_custom_call.1} parent=5 // pred_check_branch
        %97 = sbr.rel (%p94) target = $region12
      $region11: #{tpu_custom_call.1} parent=5 // pred_region
        %s98 = ssub.s32 %s11, 1
        // Predicated region
        $region13: #{tpu_custom_call.1} parent=11 // pred_check
          %p99 = pneg %p32
        $region14: #{tpu_custom_call.1} parent=11 // pred_check_branch
          %101 = sbr.rel (%p99) target = $region16
        $region15: #{tpu_custom_call.1} parent=11 // pred_region
          _
        $region16: #{tpu_custom_call.1} parent=11 // pred_fallthru
          _
      $region12: #{tpu_custom_call.1} parent=5 // pred_fallthru
        _
      %p102 = scmp.lt.s32.totalorder %s11, 4
      // Predicated region
      $region17: #{tpu_custom_call.1} parent=5 // pred_check
        %p103 = pneg %p102
      $region18: #{tpu_custom_call.1} parent=5 // pred_check_branch
        %105 = sbr.rel (%p103) target = $region20
      $region19: #{tpu_custom_call.1} parent=5 // pred_region
        // Predicated region
        $region21: #{tpu_custom_call.1} parent=19 // pred_check
          %p106 = pneg %p52
        $region22: #{tpu_custom_call.1} parent=19 // pred_check_branch
          %108 = sbr.rel (%p106) target = $region24
        $region23: #{tpu_custom_call.1} parent=19 // pred_region
          %p109 = scmp.lt.s32.totalorder %s11, 3
          %s110 = scalar_select %p109, %s11, 3
          %s111 = smul.addr %s110, 2
          %s112 = scalar_lea.vmem %s1, %s111
        $region24: #{tpu_custom_call.1} parent=19 // pred_fallthru
          _
      $region20: #{tpu_custom_call.1} parent=5 // pred_fallthru
        _
      %p113 = scmp.le.s32.totalorder 1, %s11
      %p114 = scmp.lt.s32.totalorder %s11, 5
      %p115 = pnand %p113, %p114
      %p116 = pneg %p115
      // Predicated region
      $region25: #{tpu_custom_call.1} parent=5 // pred_check
        _
      $region26: #{tpu_custom_call.1} parent=5 // pred_check_branch
        %118 = sbr.rel (%p115) target = $region28
      $region27: #{tpu_custom_call.1} parent=5 // pred_region
        %s119 = ssub.s32 %s11, 1
        %p120 = pneg %p32
        %p121 = pneg %p29
        %p122 = scmp.lt.s32.totalorder %s16, 3
        %s123 = scalar_select %p122, %s16, 3
        %s124 = smul.addr %s123, 2
        %s125 = scalar_lea.vmem %s1, %s124
        %p126 = pneg %p58
        %p127 = pneg %p55
        %p128 = pneg %p84
        %p129 = pneg %p81
        %s130 = sand.u32 %s71, 1
        %s131 = scalar_lea.sflag [#allocation3], %s130
        %s132 = sand.u32 %s71, 1
        %s133 = smul.addr %s132, 256
        %s134 = scalar_lea.vmem [#allocation2], %s133
        %p135 = scmp.lt.s32.totalorder %s16, 3
        %s136 = scalar_select %p135, %s16, 3
        %s137 = smul.addr %s136, 2
        %s138 = scalar_lea.vmem %s1, %s137
        %v139 = vld [vmem:[%s0] sm:$0xff]
        %v140 = vld [vmem:[%s0 + $0x8] sm:$0xff]
        %v141 = vld [vmem:[%s0 + $0x10] sm:$0xff]
        %v142 = vld [vmem:[%s0 + $0x18] sm:$0xff]
        %v143 = vld [vmem:[%s0 + $0x20] sm:$0xff]
        %v144 = vld [vmem:[%s0 + $0x28] sm:$0xff]
        %v145 = vld [vmem:[%s0 + $0x30] sm:$0xff]
        %v146 = vld [vmem:[%s0 + $0x38] sm:$0xff]
        %v147 = vld [vmem:[%s0 + $0x40] sm:$0xff]
        %v148 = vld [vmem:[%s0 + $0x48] sm:$0xff]
        %v149 = vld [vmem:[%s0 + $0x50] sm:$0xff]
        %v150 = vld [vmem:[%s0 + $0x58] sm:$0xff]
        %v151 = vld [vmem:[%s0 + $0x60] sm:$0xff]
        %v152 = vld [vmem:[%s0 + $0x68] sm:$0xff]
        %v153 = vld [vmem:[%s0 + $0x70] sm:$0xff]
        %v154 = vld [vmem:[%s0 + $0x78] sm:$0xff]
        %v155 = vld [vmem:[%s0 + $0x80] sm:$0xff]
        %v156 = vld [vmem:[%s0 + $0x88] sm:$0xff]
        %v157 = vld [vmem:[%s0 + $0x90] sm:$0xff]
        %v158 = vld [vmem:[%s0 + $0x98] sm:$0xff]
        %v159 = vld [vmem:[%s0 + $0xa0] sm:$0xff]
        %v160 = vld [vmem:[%s0 + $0xa8] sm:$0xff]
        %v161 = vld [vmem:[%s0 + $0xb0] sm:$0xff]
        %v162 = vld [vmem:[%s0 + $0xb8] sm:$0xff]
        %v163 = vld [vmem:[%s0 + $0xc0] sm:$0xff]
        %v164 = vld [vmem:[%s0 + $0xc8] sm:$0xff]
        %v165 = vld [vmem:[%s0 + $0xd0] sm:$0xff]
        %v166 = vld [vmem:[%s0 + $0xd8] sm:$0xff]
        %v167 = vld [vmem:[%s0 + $0xe0] sm:$0xff]
        %v168 = vld [vmem:[%s0 + $0xe8] sm:$0xff]
        %v169 = vld [vmem:[%s0 + $0xf0] sm:$0xff]
        %v170 = vld [vmem:[%s0 + $0xf8] sm:$0xff]
        %v171 = vld [vmem:[%s138] sm:$0x3]
        %173 = vset.pattern.permute.xlu0 0
        %174 = vperm.xlu0 %173, %v139
        %v175 = vpop.permute.xlu0 %174
        %178 = vset.pattern.permute.xlu0 0
        %179 = vperm.xlu0 %178, %v140
        %v180 = vpop.permute.xlu0 %179
        %183 = vset.pattern.permute.xlu0 0
        %184 = vperm.xlu0 %183, %v141
        %v185 = vpop.permute.xlu0 %184
        %188 = vset.pattern.permute.xlu0 0
        %189 = vperm.xlu0 %188, %v142
        %v190 = vpop.permute.xlu0 %189
        %193 = vset.pattern.permute.xlu0 0
        %194 = vperm.xlu0 %193, %v143
        %v195 = vpop.permute.xlu0 %194
        %198 = vset.pattern.permute.xlu0 0
        %199 = vperm.xlu0 %198, %v144
        %v200 = vpop.permute.xlu0 %199
        %203 = vset.pattern.permute.xlu0 0
        %204 = vperm.xlu0 %203, %v145
        %v205 = vpop.permute.xlu0 %204
        %208 = vset.pattern.permute.xlu0 0
        %209 = vperm.xlu0 %208, %v146
        %v210 = vpop.permute.xlu0 %209
        %213 = vset.pattern.permute.xlu0 0
        %214 = vperm.xlu0 %213, %v147
        %v215 = vpop.permute.xlu0 %214
        %218 = vset.pattern.permute.xlu0 0
        %219 = vperm.xlu0 %218, %v148
        %v220 = vpop.permute.xlu0 %219
        %223 = vset.pattern.permute.xlu0 0
        %224 = vperm.xlu0 %223, %v149
        %v225 = vpop.permute.xlu0 %224
        %228 = vset.pattern.permute.xlu0 0
        %229 = vperm.xlu0 %228, %v150
        %v230 = vpop.permute.xlu0 %229
        %233 = vset.pattern.permute.xlu0 0
        %234 = vperm.xlu0 %233, %v151
        %v235 = vpop.permute.xlu0 %234
        %238 = vset.pattern.permute.xlu0 0
        %239 = vperm.xlu0 %238, %v152
        %v240 = vpop.permute.xlu0 %239
        %243 = vset.pattern.permute.xlu0 0
        %244 = vperm.xlu0 %243, %v153
        %v245 = vpop.permute.xlu0 %244
        %248 = vset.pattern.permute.xlu0 0
        %249 = vperm.xlu0 %248, %v154
        %v250 = vpop.permute.xlu0 %249
        %253 = vset.pattern.permute.xlu0 0
        %254 = vperm.xlu0 %253, %v155
        %v255 = vpop.permute.xlu0 %254
        %258 = vset.pattern.permute.xlu0 0
        %259 = vperm.xlu0 %258, %v156
        %v260 = vpop.permute.xlu0 %259
        %263 = vset.pattern.permute.xlu0 0
        %264 = vperm.xlu0 %263, %v157
        %v265 = vpop.permute.xlu0 %264
        %268 = vset.pattern.permute.xlu0 0
        %269 = vperm.xlu0 %268, %v158
        %v270 = vpop.permute.xlu0 %269
        %273 = vset.pattern.permute.xlu0 0
        %274 = vperm.xlu0 %273, %v159
        %v275 = vpop.permute.xlu0 %274
        %278 = vset.pattern.permute.xlu0 0
        %279 = vperm.xlu0 %278, %v160
        %v280 = vpop.permute.xlu0 %279
        %283 = vset.pattern.permute.xlu0 0
        %284 = vperm.xlu0 %283, %v161
        %v285 = vpop.permute.xlu0 %284
        %288 = vset.pattern.permute.xlu0 0
        %289 = vperm.xlu0 %288, %v162
        %v290 = vpop.permute.xlu0 %289
        %293 = vset.pattern.permute.xlu0 0
        %294 = vperm.xlu0 %293, %v163
        %v295 = vpop.permute.xlu0 %294
        %298 = vset.pattern.permute.xlu0 0
        %299 = vperm.xlu0 %298, %v164
        %v300 = vpop.permute.xlu0 %299
        %303 = vset.pattern.permute.xlu0 0
        %304 = vperm.xlu0 %303, %v165
        %v305 = vpop.permute.xlu0 %304
        %308 = vset.pattern.permute.xlu0 0
        %309 = vperm.xlu0 %308, %v166
        %v310 = vpop.permute.xlu0 %309
        %313 = vset.pattern.permute.xlu0 0
        %314 = vperm.xlu0 %313, %v167
        %v315 = vpop.permute.xlu0 %314
        %318 = vset.pattern.permute.xlu0 0
        %319 = vperm.xlu0 %318, %v168
        %v320 = vpop.permute.xlu0 %319
        %323 = vset.pattern.permute.xlu0 0
        %324 = vperm.xlu0 %323, %v169
        %v325 = vpop.permute.xlu0 %324
        %328 = vset.pattern.permute.xlu0 0
        %329 = vperm.xlu0 %328, %v170
        %v330 = vpop.permute.xlu0 %329
        %v332 = vlaneseq
        %v333 = vshrl.u32 %v332, 7
        %v334 = vsub.s32 0, %v333
        %v335 = vrot.slane %v171, %v334
        %v336 = vmul.f32 %v175, %v335
        %v337 = vmul.f32 %v180, %v335
        %v338 = vmul.f32 %v185, %v335
        %v339 = vmul.f32 %v190, %v335
        %v340 = vmul.f32 %v195, %v335
        %v341 = vmul.f32 %v200, %v335
        %v342 = vmul.f32 %v205, %v335
        %v343 = vmul.f32 %v210, %v335
        %v344 = vmul.f32 %v215, %v335
        %v345 = vmul.f32 %v220, %v335
        %v346 = vmul.f32 %v225, %v335
        %v347 = vmul.f32 %v230, %v335
        %v348 = vmul.f32 %v235, %v335
        %v349 = vmul.f32 %v240, %v335
        %v350 = vmul.f32 %v245, %v335
        %v351 = vmul.f32 %v250, %v335
        %v352 = vmul.f32 %v255, %v335
        %v353 = vmul.f32 %v260, %v335
        %v354 = vmul.f32 %v265, %v335
        %v355 = vmul.f32 %v270, %v335
        %v356 = vmul.f32 %v275, %v335
        %v357 = vmul.f32 %v280, %v335
        %v358 = vmul.f32 %v285, %v335
        %v359 = vmul.f32 %v290, %v335
        %v360 = vmul.f32 %v295, %v335
        %v361 = vmul.f32 %v300, %v335
        %v362 = vmul.f32 %v305, %v335
        %v363 = vmul.f32 %v310, %v335
        %v364 = vmul.f32 %v315, %v335
        %v365 = vmul.f32 %v320, %v335
        %v366 = vmul.f32 %v325, %v335
        %v367 = vmul.f32 %v330, %v335
        %v368 = vadd.f32 %v336, 0.0
        %v369 = vadd.f32 %v337, 0.0
        %v370 = vadd.f32 %v338, 0.0
        %v371 = vadd.f32 %v339, 0.0
        %v372 = vadd.f32 %v340, 0.0
        %v373 = vadd.f32 %v341, 0.0
        %v374 = vadd.f32 %v342, 0.0
        %v375 = vadd.f32 %v343, 0.0
        %v376 = vadd.f32 %v344, 0.0
        %v377 = vadd.f32 %v345, 0.0
        %v378 = vadd.f32 %v346, 0.0
        %v379 = vadd.f32 %v347, 0.0
        %v380 = vadd.f32 %v348, 0.0
        %v381 = vadd.f32 %v349, 0.0
        %v382 = vadd.f32 %v350, 0.0
        %v383 = vadd.f32 %v351, 0.0
        %v384 = vadd.f32 %v352, 0.0
        %v385 = vadd.f32 %v353, 0.0
        %v386 = vadd.f32 %v354, 0.0
        %v387 = vadd.f32 %v355, 0.0
        %v388 = vadd.f32 %v356, 0.0
        %v389 = vadd.f32 %v357, 0.0
        %v390 = vadd.f32 %v358, 0.0
        %v391 = vadd.f32 %v359, 0.0
        %v392 = vadd.f32 %v360, 0.0
        %v393 = vadd.f32 %v361, 0.0
        %v394 = vadd.f32 %v362, 0.0
        %v395 = vadd.f32 %v363, 0.0
        %v396 = vadd.f32 %v364, 0.0
        %v397 = vadd.f32 %v365, 0.0
        %v398 = vadd.f32 %v366, 0.0
        %v399 = vadd.f32 %v367, 0.0
        %400 = vset.pattern.permute.xlu0 1
        %401 = vperm.xlu0 %400, %v139
        %v402 = vpop.permute.xlu0 %401
        %404 = vset.pattern.permute.xlu0 1
        %405 = vperm.xlu0 %404, %v140
        %v406 = vpop.permute.xlu0 %405
        %408 = vset.pattern.permute.xlu0 1
        %409 = vperm.xlu0 %408, %v141
        %v410 = vpop.permute.xlu0 %409
        %412 = vset.pattern.permute.xlu0 1
        %413 = vperm.xlu0 %412, %v142
        %v414 = vpop.permute.xlu0 %413
        %416 = vset.pattern.permute.xlu0 1
        %417 = vperm.xlu0 %416, %v143
        %v418 = vpop.permute.xlu0 %417
        %420 = vset.pattern.permute.xlu0 1
        %421 = vperm.xlu0 %420, %v144
        %v422 = vpop.permute.xlu0 %421
        %424 = vset.pattern.permute.xlu0 1
        %425 = vperm.xlu0 %424, %v145
        %v426 = vpop.permute.xlu0 %425
        %428 = vset.pattern.permute.xlu0 1
        %429 = vperm.xlu0 %428, %v146
        %v430 = vpop.permute.xlu0 %429
        %432 = vset.pattern.permute.xlu0 1
        %433 = vperm.xlu0 %432, %v147
        %v434 = vpop.permute.xlu0 %433
        %436 = vset.pattern.permute.xlu0 1
        %437 = vperm.xlu0 %436, %v148
        %v438 = vpop.permute.xlu0 %437
        %440 = vset.pattern.permute.xlu0 1
        %441 = vperm.xlu0 %440, %v149
        %v442 = vpop.permute.xlu0 %441
        %444 = vset.pattern.permute.xlu0 1
        %445 = vperm.xlu0 %444, %v150
        %v446 = vpop.permute.xlu0 %445
        %448 = vset.pattern.permute.xlu0 1
        %449 = vperm.xlu0 %448, %v151
        %v450 = vpop.permute.xlu0 %449
        %452 = vset.pattern.permute.xlu0 1
        %453 = vperm.xlu0 %452, %v152
        %v454 = vpop.permute.xlu0 %453
        %456 = vset.pattern.permute.xlu0 1
        %457 = vperm.xlu0 %456, %v153
        %v458 = vpop.permute.xlu0 %457
        %460 = vset.pattern.permute.xlu0 1
        %461 = vperm.xlu0 %460, %v154
        %v462 = vpop.permute.xlu0 %461
        %464 = vset.pattern.permute.xlu0 1
        %465 = vperm.xlu0 %464, %v155
        %v466 = vpop.permute.xlu0 %465
        %468 = vset.pattern.permute.xlu0 1
        %469 = vperm.xlu0 %468, %v156
        %v470 = vpop.permute.xlu0 %469
        %472 = vset.pattern.permute.xlu0 1
        %473 = vperm.xlu0 %472, %v157
        %v474 = vpop.permute.xlu0 %473
        %476 = vset.pattern.permute.xlu0 1
        %477 = vperm.xlu0 %476, %v158
        %v478 = vpop.permute.xlu0 %477
        %480 = vset.pattern.permute.xlu0 1
        %481 = vperm.xlu0 %480, %v159
        %v482 = vpop.permute.xlu0 %481
        %484 = vset.pattern.permute.xlu0 1
        %485 = vperm.xlu0 %484, %v160
        %v486 = vpop.permute.xlu0 %485
        %488 = vset.pattern.permute.xlu0 1
        %489 = vperm.xlu0 %488, %v161
        %v490 = vpop.permute.xlu0 %489
        %492 = vset.pattern.permute.xlu0 1
        %493 = vperm.xlu0 %492, %v162
        %v494 = vpop.permute.xlu0 %493
        %496 = vset.pattern.permute.xlu0 1
        %497 = vperm.xlu0 %496, %v163
        %v498 = vpop.permute.xlu0 %497
        %500 = vset.pattern.permute.xlu0 1
        %501 = vperm.xlu0 %500, %v164
        %v502 = vpop.permute.xlu0 %501
        %504 = vset.pattern.permute.xlu0 1
        %505 = vperm.xlu0 %504, %v165
        %v506 = vpop.permute.xlu0 %505
        %508 = vset.pattern.permute.xlu0 1
        %509 = vperm.xlu0 %508, %v166
        %v510 = vpop.permute.xlu0 %509
        %512 = vset.pattern.permute.xlu0 1
        %513 = vperm.xlu0 %512, %v167
        %v514 = vpop.permute.xlu0 %513
        %516 = vset.pattern.permute.xlu0 1
        %517 = vperm.xlu0 %516, %v168
        %v518 = vpop.permute.xlu0 %517
        %520 = vset.pattern.permute.xlu0 1
        %521 = vperm.xlu0 %520, %v169
        %v522 = vpop.permute.xlu0 %521
        %524 = vset.pattern.permute.xlu0 1
        %525 = vperm.xlu0 %524, %v170
        %v526 = vpop.permute.xlu0 %525
        %v528 = vlaneseq
        %v529 = vshrl.u32 %v528, 7
        %v530 = vsub.s32 1, %v529
        %v531 = vrot.slane %v171, %v530
        %v532 = vmul.f32 %v402, %v531
        %v533 = vmul.f32 %v406, %v531
        %v534 = vmul.f32 %v410, %v531
        %v535 = vmul.f32 %v414, %v531
        %v536 = vmul.f32 %v418, %v531
        %v537 = vmul.f32 %v422, %v531
        %v538 = vmul.f32 %v426, %v531
        %v539 = vmul.f32 %v430, %v531
        %v540 = vmul.f32 %v434, %v531
        %v541 = vmul.f32 %v438, %v531
        %v542 = vmul.f32 %v442, %v531
        %v543 = vmul.f32 %v446, %v531
        %v544 = vmul.f32 %v450, %v531
        %v545 = vmul.f32 %v454, %v531
        %v546 = vmul.f32 %v458, %v531
        %v547 = vmul.f32 %v462, %v531
        %v548 = vmul.f32 %v466, %v531
        %v549 = vmul.f32 %v470, %v531
        %v550 = vmul.f32 %v474, %v531
        %v551 = vmul.f32 %v478, %v531
        %v552 = vmul.f32 %v482, %v531
        %v553 = vmul.f32 %v486, %v531
        %v554 = vmul.f32 %v490, %v531
        %v555 = vmul.f32 %v494, %v531
        %v556 = vmul.f32 %v498, %v531
        %v557 = vmul.f32 %v502, %v531
        %v558 = vmul.f32 %v506, %v531
        %v559 = vmul.f32 %v510, %v531
        %v560 = vmul.f32 %v514, %v531
        %v561 = vmul.f32 %v518, %v531
        %v562 = vmul.f32 %v522, %v531
        %v563 = vmul.f32 %v526, %v531
        %v564 = vadd.f32 %v368, %v532
        %v565 = vadd.f32 %v369, %v533
        %v566 = vadd.f32 %v370, %v534
        %v567 = vadd.f32 %v371, %v535
        %v568 = vadd.f32 %v372, %v536
        %v569 = vadd.f32 %v373, %v537
        %v570 = vadd.f32 %v374, %v538
        %v571 = vadd.f32 %v375, %v539
        %v572 = vadd.f32 %v376, %v540
        %v573 = vadd.f32 %v377, %v541
        %v574 = vadd.f32 %v378, %v542
        %v575 = vadd.f32 %v379, %v543
        %v576 = vadd.f32 %v380, %v544
        %v577 = vadd.f32 %v381, %v545
        %v578 = vadd.f32 %v382, %v546
        %v579 = vadd.f32 %v383, %v547
        %v580 = vadd.f32 %v384, %v548
        %v581 = vadd.f32 %v385, %v549
        %v582 = vadd.f32 %v386, %v550
        %v583 = vadd.f32 %v387, %v551
        %v584 = vadd.f32 %v388, %v552
        %v585 = vadd.f32 %v389, %v553
        %v586 = vadd.f32 %v390, %v554
        %v587 = vadd.f32 %v391, %v555
        %v588 = vadd.f32 %v392, %v556
        %v589 = vadd.f32 %v393, %v557
        %v590 = vadd.f32 %v394, %v558
        %v591 = vadd.f32 %v395, %v559
        %v592 = vadd.f32 %v396, %v560
        %v593 = vadd.f32 %v397, %v561
        %v594 = vadd.f32 %v398, %v562
        %v595 = vadd.f32 %v399, %v563
        %596 = vst [vmem:[%s134] sm:$0xff] %v564
        %597 = vst [vmem:[%s134 + $0x8] sm:$0xff] %v565
        %598 = vst [vmem:[%s134 + $0x10] sm:$0xff] %v566
        %599 = vst [vmem:[%s134 + $0x18] sm:$0xff] %v567
        %600 = vst [vmem:[%s134 + $0x20] sm:$0xff] %v568
        %601 = vst [vmem:[%s134 + $0x28] sm:$0xff] %v569
        %602 = vst [vmem:[%s134 + $0x30] sm:$0xff] %v570
        %603 = vst [vmem:[%s134 + $0x38] sm:$0xff] %v571
        %604 = vst [vmem:[%s134 + $0x40] sm:$0xff] %v572
        %605 = vst [vmem:[%s134 + $0x48] sm:$0xff] %v573
        %606 = vst [vmem:[%s134 + $0x50] sm:$0xff] %v574
        %607 = vst [vmem:[%s134 + $0x58] sm:$0xff] %v575
        %608 = vst [vmem:[%s134 + $0x60] sm:$0xff] %v576
        %609 = vst [vmem:[%s134 + $0x68] sm:$0xff] %v577
        %610 = vst [vmem:[%s134 + $0x70] sm:$0xff] %v578
        %611 = vst [vmem:[%s134 + $0x78] sm:$0xff] %v579
        %612 = vst [vmem:[%s134 + $0x80] sm:$0xff] %v580
        %613 = vst [vmem:[%s134 + $0x88] sm:$0xff] %v581
        %614 = vst [vmem:[%s134 + $0x90] sm:$0xff] %v582
        %615 = vst [vmem:[%s134 + $0x98] sm:$0xff] %v583
        %616 = vst [vmem:[%s134 + $0xa0] sm:$0xff] %v584
        %617 = vst [vmem:[%s134 + $0xa8] sm:$0xff] %v585
        %618 = vst [vmem:[%s134 + $0xb0] sm:$0xff] %v586
        %619 = vst [vmem:[%s134 + $0xb8] sm:$0xff] %v587
        %620 = vst [vmem:[%s134 + $0xc0] sm:$0xff] %v588
        %621 = vst [vmem:[%s134 + $0xc8] sm:$0xff] %v589
        %622 = vst [vmem:[%s134 + $0xd0] sm:$0xff] %v590
        %623 = vst [vmem:[%s134 + $0xd8] sm:$0xff] %v591
        %624 = vst [vmem:[%s134 + $0xe0] sm:$0xff] %v592
        %625 = vst [vmem:[%s134 + $0xe8] sm:$0xff] %v593
        %626 = vst [vmem:[%s134 + $0xf0] sm:$0xff] %v594
        %627 = vst [vmem:[%s134 + $0xf8] sm:$0xff] %v595
        %s628 = sand.u32 %s71, 1
        %s629 = scalar_lea.sflag [#allocation3], %s628
        %s630 = sand.u32 %s71, 1
        %s631 = smul.addr %s630, 256
        %s632 = scalar_lea.vmem [#allocation2], %s631
        // Predicated region
        $region29: #{tpu_custom_call.1} parent=27 // pred_check
          %p633 = pneg %p81
        $region30: #{tpu_custom_call.1} parent=27 // pred_check_branch
          %635 = sbr.rel (%p633) target = $region32
        $region31: #{tpu_custom_call.1} parent=27 // pred_region
          %s637 = ssub.s32 4096, 4096
          %638 = vsyncadd %s629, %s637
          %s639 = smul.addr %s16, 32
          %s640 = smul.addr %s639, 128
          %s641 = scalar_lea.hbm %s2, %s640
          %s642 = sshll.u32 %s632, 4
          %s643 = int_to_ptr.vmem [resolvable:$true] %s642
          %648 = dma.vmem_to_hbm [thread:$0]  %s643, 4096, %s641, %s629, 128, 128, 8
        $region32: #{tpu_custom_call.1} parent=27 // pred_fallthru
          _
      $region28: #{tpu_custom_call.1} parent=5 // pred_fallthru
        _
      %p649 = scmp.le.s32.totalorder 2, %s11
      // Predicated region
      $region33: #{tpu_custom_call.1} parent=5 // pred_check
        %p650 = pneg %p649
      $region34: #{tpu_custom_call.1} parent=5 // pred_check_branch
        %652 = sbr.rel (%p650) target = $region36
      $region35: #{tpu_custom_call.1} parent=5 // pred_region
        %s653 = ssub.s32 %s11, 2
        // Predicated region
        $region37: #{tpu_custom_call.1} parent=35 // pred_check
          %p654 = pneg %p87
        $region38: #{tpu_custom_call.1} parent=35 // pred_check_branch
          %656 = sbr.rel (%p654) target = $region40
        $region39: #{tpu_custom_call.1} parent=35 // pred_region
          %s657 = sand.u32 %s72, 1
          %s658 = scalar_lea.sflag [#allocation3], %s657
          %s659 = sand.u32 %s72, 1
          %s660 = smul.addr %s659, 256
          %s661 = scalar_lea.vmem [#allocation2], %s660
          %662 = dma.done %s658, 4096
        $region40: #{tpu_custom_call.1} parent=35 // pred_fallthru
          _
      $region36: #{tpu_custom_call.1} parent=5 // pred_fallthru
        _
    $region6: #{tpu_custom_call.1} parent=1 // loop_footer
      %s15 = sadd.s32 1, %s11
    $region7: #{tpu_custom_call.1} parent=1 // loop_footer_branch
      %10 = sbr.rel target = $region3
    $region8: #{tpu_custom_call.1} parent=1 // loop_exit
      _
    %663 = vsyncpa [#allocation3], 1
    %s664 = scalar_lea.sflag [#allocation3], 1
    %665 = vsyncpa %s664, 1

</llo_original>
